<compile_context>
chip_gen: v7x
topology: tpu7x:2x2x1
jax: 0.10.0
libtpu: 0.0.40
codegen_flags: <defaults>
</compile_context>

<pallas_src>
import numpy as np
import jax
import jax.numpy as jnp
from jax.experimental import pallas as pl
from jax.experimental.pallas import tpu as pltpu

_LANE = 128
_SUBLANE = 8
_R_PAD = 128  # LoRA rank zero-padded to one full lane group


def _round_up(x, m):
    return (x + m - 1) // m * m


def _lora_linear_kernel(x_ref, wt_ref, bias_ref, at_ref, bt_ref, o_ref,
                        acc_ref, xa_ref):
    j = pl.program_id(1)
    k = pl.program_id(2)

    @pl.when(k == 0)
    def _init_acc():
        # Seed the accumulator with the bias (broadcast over rows) so the epilogue
        # is just one rank-128 MXU matmul + add + store.
        acc_ref[...] = jnp.zeros(acc_ref.shape, jnp.float32) + bias_ref[...]

    @pl.when((j == 0) & (k == 0))
    def _init_xa():
        xa_ref[...] = jnp.zeros_like(xa_ref)

    x = x_ref[...]                                             # (tm, tk) bf16
    # Base path partial product: x_k @ W.T_k  (fp32 accumulate on the MXU).
    acc_ref[...] += jnp.dot(x, wt_ref[...], preferred_element_type=jnp.float32)

    # LoRA-A partial product: x_k @ A.T_k.  Only computed on the first pass over N
    # (j == 0); the (tm, 128) fp32 result persists in scratch and is reused for j > 0.
    @pl.when(j == 0)
    def _lora_a():
        xa_ref[...] += jnp.dot(x, at_ref[...], preferred_element_type=jnp.float32)

    @pl.when(k == pl.num_programs(2) - 1)
    def _finish():
        # scaling is already folded into bt (scaled B.T) by prepare_lora_params.
        lora = jnp.dot(xa_ref[...].astype(bt_ref.dtype), bt_ref[...],
                       preferred_element_type=jnp.float32)
        o_ref[...] = (acc_ref[...] + lora).astype(o_ref.dtype)


def prepare_lora_params(weight, bias, lora_A, lora_B, *, lora_alpha, r,
                        tn=2048, tk=1024, compute_dtype=jnp.bfloat16):
    """One-time parameter preparation (hoisted out of the forward path).

    Pads K/N to multiples of the (clamped) tn/tk tiles, transposes W, rank-pads the
    LoRA factors to 128 lanes and folds the scaling into B.  Returns a dict consumed
    by lora_linear.
    """
    out_features, in_features = weight.shape
    scaling = lora_alpha / r

    # Effective N/K tiles: multiples of 128 lanes, clamped to the problem size.
    tn_eff = min(tn, _round_up(out_features, _LANE))
    tk_eff = min(tk, _round_up(in_features, _LANE))
    n_pad = _round_up(out_features, tn_eff)
    k_pad = _round_up(in_features, tk_eff)

    wt = jnp.zeros((k_pad, n_pad), compute_dtype)
    wt = wt.at[:in_features, :out_features].set(weight.T.astype(compute_dtype))
    at = jnp.zeros((k_pad, _R_PAD), compute_dtype)
    at = at.at[:in_features, :r].set(lora_A.T.astype(compute_dtype))
    bt = jnp.zeros((_R_PAD, n_pad), compute_dtype)
    bt = bt.at[:r, :out_features].set((lora_B.T * scaling).astype(compute_dtype))
    bias2d = jnp.zeros((1, n_pad), jnp.float32)
    if bias is not None:
        bias2d = bias2d.at[0, :out_features].set(bias.astype(jnp.float32))

    return dict(wt=wt, bias2d=bias2d, at=at, bt=bt,
                in_features=in_features, out_features=out_features,
                tn=tn_eff, tk=tk_eff, compute_dtype=compute_dtype)


def lora_linear(x2d, params, *, tm=1024, out_dtype=jnp.bfloat16,
                input_buffers=None, vmem_limit_bytes=None):
    """x2d: (M, in_features); params from prepare_lora_params (already padded)."""
    M, in_features = x2d.shape
    assert in_features == params["in_features"]
    wt, bias2d, at, bt = params["wt"], params["bias2d"], params["at"], params["bt"]
    tn, tk = params["tn"], params["tk"]
    compute_dtype = params["compute_dtype"]
    k_pad, n_pad = wt.shape
    out_features = params["out_features"]

    # tm multiple of 8 sublanes, clamped to the (padded) problem size.
    tm = min(tm, _round_up(M, _SUBLANE))
    m_pad = _round_up(M, tm)

    x = x2d.astype(compute_dtype)
    if m_pad != M or k_pad != in_features:
        x = jnp.pad(x, ((0, m_pad - M), (0, k_pad - in_features)))

    grid = (m_pad // tm, n_pad // tn, k_pad // tk)

    if vmem_limit_bytes is None:
        out_bytes = np.dtype(out_dtype).itemsize
        est = (2 * tm * tk * 2            # x tiles (double-buffered, bf16)
               + 2 * tk * tn * 2          # W.T tiles
               + 2 * tm * tn * out_bytes  # output tiles
               + 2 * tk * _R_PAD * 2      # A.T tiles
               + 2 * _R_PAD * tn * 2      # scaled B.T tiles
               + 2 * tn * 4               # bias tiles
               + tm * tn * 4              # fp32 accumulator
               + tm * _R_PAD * 4)         # fp32 x@A.T scratch
        # Cap at 56 MiB so it always fits v7x's 64 MiB/TC (v5e/v6e have 128 MiB).
        vmem_limit_bytes = max(32 << 20, min(int(est * 3 // 2), 56 << 20))

    def _stream_spec(shape, imap):
        if input_buffers is None:
            return pl.BlockSpec(shape, imap)
        return pl.BlockSpec(shape, imap, pipeline_mode=input_buffers)

    out = pl.pallas_call(
        _lora_linear_kernel,
        out_shape=jax.ShapeDtypeStruct((m_pad, n_pad), out_dtype),
        grid_spec=pltpu.PrefetchScalarGridSpec(
            num_scalar_prefetch=0,
            grid=grid,
            in_specs=[
                _stream_spec((tm, tk), lambda i, j, k: (i, k)),      # x tile
                _stream_spec((tk, tn), lambda i, j, k: (k, j)),      # W.T tile
                pl.BlockSpec((1, tn), lambda i, j, k: (0, j)),       # bias tile
                pl.BlockSpec((tk, _R_PAD), lambda i, j, k: (k, 0)),  # A.T tile
                pl.BlockSpec((_R_PAD, tn), lambda i, j, k: (0, j)),  # scaled B.T tile
            ],
            out_specs=pl.BlockSpec((tm, tn), lambda i, j, k: (i, j)),
            scratch_shapes=[
                pltpu.VMEM((tm, tn), jnp.float32),      # base accumulator (+bias)
                pltpu.VMEM((tm, _R_PAD), jnp.float32),  # x @ A.T (persists across j)
            ],
        ),
        compiler_params=pltpu.CompilerParams(
            # j must stay "arbitrary": the xa scratch written at j == 0 is reused at
            # j > 0, so j may not be sharded across TensorCores (v7x megacore).
            dimension_semantics=("parallel", "arbitrary", "arbitrary"),
            vmem_limit_bytes=vmem_limit_bytes,
        ),
    )(x, wt, bias2d, at, bt)

    if m_pad != M or n_pad != out_features:
        out = out[:M, :out_features]
    return out


if __name__ == "__main__":
    # Small shapes consistent with the module's forward.
    batch, seq = 2, 8
    in_features, out_features = 128, 256
    r, lora_alpha = 8, 16

    key = jax.random.PRNGKey(0)
    kx, kw, kb, ka, kB = jax.random.split(key, 5)

    x = jax.random.normal(kx, (batch, seq, in_features), dtype=jnp.float32)
    weight = jax.random.normal(kw, (out_features, in_features), dtype=jnp.float32) * 0.05
    bias = jax.random.normal(kb, (out_features,), dtype=jnp.float32) * 0.1
    # kaiming_uniform-ish init for lora_A (deterministic, in-script).
    bound = 1.0 / (in_features ** 0.5)
    lora_A = jax.random.uniform(ka, (r, in_features), minval=-bound, maxval=bound,
                                dtype=jnp.float32)
    # NOTE: the PyTorch module zero-inits lora_B; use small random values so the
    # LoRA branch is numerically exercised.
    lora_B = jax.random.normal(kB, (out_features, r), dtype=jnp.float32) * 0.02

    # One-time parameter prep (transpose / pad / fold scaling / bf16 cast).
    params = prepare_lora_params(weight, bias, lora_A, lora_B,
                                 lora_alpha=lora_alpha, r=r)

    x2d = x.reshape(batch * seq, in_features)
    out2d = lora_linear(x2d, params)
    out = out2d.reshape(batch, seq, out_features)
    jax.block_until_ready(out)

    # Pure-JAX fp32 reference of the PyTorch forward (dropout=0 -> identity).
    scaling = lora_alpha / r
    ref = x @ weight.T + bias + (x @ lora_A.T @ lora_B.T) * scaling

    # bf16 MXU inputs / bf16 output with fp32 accumulation -> loosened tolerance.
    assert jnp.allclose(out.astype(jnp.float32), ref, atol=5e-2, rtol=5e-2), \
        "mismatch vs reference"
    print("KERNEL_OK")
</pallas_src>

<mosaic_0001>
module attributes {stable_mosaic.version = 11 : i64} {
  func.func @_lora_linear_kernel(%arg0: i32, %arg1: i32, %arg2: i32, %arg3: memref<16x128xbf16, #tpu.memory_space<vmem>>, %arg4: memref<128x256xbf16, #tpu.memory_space<vmem>>, %arg5: memref<1x256xf32, #tpu.memory_space<vmem>>, %arg6: memref<128x128xbf16, #tpu.memory_space<vmem>>, %arg7: memref<128x256xbf16, #tpu.memory_space<vmem>>, %arg8: memref<16x256xbf16, #tpu.memory_space<vmem>>, %arg9: memref<16x256xf32, #tpu.memory_space<vmem>>, %arg10: memref<16x128xf32, #tpu.memory_space<vmem>>) attributes {dimension_semantics = [#tpu.dimension_semantics<parallel>, #tpu.dimension_semantics<arbitrary>, #tpu.dimension_semantics<arbitrary>], iteration_bounds = array<i64: 1, 1, 1>, scalar_prefetch = 0 : i64, scratch_operands = 2 : i64, tpu.core_type = #tpu.core_type<tc>, window_params = [{transform_indices = @transform_0, window_bounds = array<i64: 16, 128>}, {transform_indices = @transform_1, window_bounds = array<i64: 128, 256>}, {transform_indices = @transform_2, window_bounds = array<i64: 1, 256>}, {transform_indices = @transform_3, window_bounds = array<i64: 128, 128>}, {transform_indices = @transform_4, window_bounds = array<i64: 128, 256>}, {transform_indices = @transform_5, window_bounds = array<i64: 16, 256>}]} {
    %c0_i32 = arith.constant 0 : i32
    %0 = arith.cmpi eq, %arg2, %c0_i32 : i32
    %1 = arith.extui %0 : i1 to i32
    %c0_i32_0 = arith.constant 0 : i32
    %2 = arith.cmpi ne, %1, %c0_i32_0 : i32
    scf.if %2 {
      %cst_15 = arith.constant 0.000000e+00 : f32
      %20 = vector.broadcast %cst_15 : f32 to vector<16x256xf32>
      %c0_16 = arith.constant 0 : index
      %c0_17 = arith.constant 0 : index
      %21 = vector.load %arg5[%c0_16, %c0_17] : memref<1x256xf32, #tpu.memory_space<vmem>>, vector<1x256xf32>
      %22 = vector.broadcast %21 : vector<1x256xf32> to vector<16x256xf32>
      %23 = arith.addf %20, %22 : vector<16x256xf32>
      %c0_18 = arith.constant 0 : index
      %c0_19 = arith.constant 0 : index
      %24 = vector.load %arg9[%c0_18, %c0_19] : memref<16x256xf32, #tpu.memory_space<vmem>>, vector<16x256xf32>
      tpu.vector_store %arg9[%c0_18, %c0_19], %23 {strides = array<i32>} : memref<16x256xf32, #tpu.memory_space<vmem>>, vector<16x256xf32>,
    } else {
    }
    %c0_i32_1 = arith.constant 0 : i32
    %3 = arith.cmpi eq, %arg1, %c0_i32_1 : i32
    %c0_i32_2 = arith.constant 0 : i32
    %4 = arith.cmpi eq, %arg2, %c0_i32_2 : i32
    %5 = arith.andi %3, %4 : i1
    %6 = arith.extui %5 : i1 to i32
    %c0_i32_3 = arith.constant 0 : i32
    %7 = arith.cmpi ne, %6, %c0_i32_3 : i32
    scf.if %7 {
      %cst_15 = arith.constant 0.000000e+00 : f32
      %20 = vector.broadcast %cst_15 : f32 to vector<16x128xf32>
      %c0_16 = arith.constant 0 : index
      %c0_17 = arith.constant 0 : index
      %21 = vector.load %arg10[%c0_16, %c0_17] : memref<16x128xf32, #tpu.memory_space<vmem>>, vector<16x128xf32>
      tpu.vector_store %arg10[%c0_16, %c0_17], %20 {strides = array<i32>} : memref<16x128xf32, #tpu.memory_space<vmem>>, vector<16x128xf32>,
    } else {
    }
    %c0 = arith.constant 0 : index
    %c0_4 = arith.constant 0 : index
    %8 = vector.load %arg3[%c0, %c0_4] : memref<16x128xbf16, #tpu.memory_space<vmem>>, vector<16x128xbf16>
    %c0_5 = arith.constant 0 : index
    %c0_6 = arith.constant 0 : index
    %9 = vector.load %arg9[%c0_5, %c0_6] : memref<16x256xf32, #tpu.memory_space<vmem>>, vector<16x256xf32>
    %c0_7 = arith.constant 0 : index
    %c0_8 = arith.constant 0 : index
    %10 = vector.load %arg4[%c0_7, %c0_8] : memref<128x256xbf16, #tpu.memory_space<vmem>>, vector<128x256xbf16>
    %cst = arith.constant dense<0.000000e+00> : vector<16x256xf32>
    %11 = tpu.matmul %8, %10, %cst {dimension_numbers = #tpu.dot_dimension_numbers<[1], [0], [0], [1], [0, 0, 1, 1], [], []>} : vector<16x128xbf16>, vector<128x256xbf16>, vector<16x256xf32> -> vector<16x256xf32>
    %12 = arith.addf %9, %11 : vector<16x256xf32>
    %c0_9 = arith.constant 0 : index
    %c0_10 = arith.constant 0 : index
    %13 = vector.load %arg9[%c0_9, %c0_10] : memref<16x256xf32, #tpu.memory_space<vmem>>, vector<16x256xf32>
    tpu.vector_store %arg9[%c0_9, %c0_10], %12 {strides = array<i32>} : memref<16x256xf32, #tpu.memory_space<vmem>>, vector<16x256xf32>,
    %c0_i32_11 = arith.constant 0 : i32
    %14 = arith.cmpi eq, %arg1, %c0_i32_11 : i32
    %15 = arith.extui %14 : i1 to i32
    %c0_i32_12 = arith.constant 0 : i32
    %16 = arith.cmpi ne, %15, %c0_i32_12 : i32
    scf.if %16 {
      %c0_15 = arith.constant 0 : index
      %c0_16 = arith.constant 0 : index
      %20 = vector.load %arg10[%c0_15, %c0_16] : memref<16x128xf32, #tpu.memory_space<vmem>>, vector<16x128xf32>
      %c0_17 = arith.constant 0 : index
      %c0_18 = arith.constant 0 : index
      %21 = vector.load %arg6[%c0_17, %c0_18] : memref<128x128xbf16, #tpu.memory_space<vmem>>, vector<128x128xbf16>
      %cst_19 = arith.constant dense<0.000000e+00> : vector<16x128xf32>
      %22 = tpu.matmul %8, %21, %cst_19 {dimension_numbers = #tpu.dot_dimension_numbers<[1], [0], [0], [1], [0, 0, 1, 1], [], []>} : vector<16x128xbf16>, vector<128x128xbf16>, vector<16x128xf32> -> vector<16x128xf32>
      %23 = arith.addf %20, %22 : vector<16x128xf32>
      %c0_20 = arith.constant 0 : index
      %c0_21 = arith.constant 0 : index
      %24 = vector.load %arg10[%c0_20, %c0_21] : memref<16x128xf32, #tpu.memory_space<vmem>>, vector<16x128xf32>
      tpu.vector_store %arg10[%c0_20, %c0_21], %23 {strides = array<i32>} : memref<16x128xf32, #tpu.memory_space<vmem>>, vector<16x128xf32>,
    } else {
    }
    %c0_i32_13 = arith.constant 0 : i32
    %17 = arith.cmpi eq, %arg2, %c0_i32_13 : i32
    %18 = arith.extui %17 : i1 to i32
    %c0_i32_14 = arith.constant 0 : i32
    %19 = arith.cmpi ne, %18, %c0_i32_14 : i32
    scf.if %19 {
      %c0_15 = arith.constant 0 : index
      %c0_16 = arith.constant 0 : index
      %20 = vector.load %arg10[%c0_15, %c0_16] : memref<16x128xf32, #tpu.memory_space<vmem>>, vector<16x128xf32>
      %21 = arith.truncf %20 : vector<16x128xf32> to vector<16x128xbf16>
      %c0_17 = arith.constant 0 : index
      %c0_18 = arith.constant 0 : index
      %22 = vector.load %arg7[%c0_17, %c0_18] : memref<128x256xbf16, #tpu.memory_space<vmem>>, vector<128x256xbf16>
      %cst_19 = arith.constant dense<0.000000e+00> : vector<16x256xf32>
      %23 = tpu.matmul %21, %22, %cst_19 {dimension_numbers = #tpu.dot_dimension_numbers<[1], [0], [0], [1], [0, 0, 1, 1], [], []>} : vector<16x128xbf16>, vector<128x256xbf16>, vector<16x256xf32> -> vector<16x256xf32>
      %c0_20 = arith.constant 0 : index
      %c0_21 = arith.constant 0 : index
      %24 = vector.load %arg9[%c0_20, %c0_21] : memref<16x256xf32, #tpu.memory_space<vmem>>, vector<16x256xf32>
      %25 = arith.addf %24, %23 : vector<16x256xf32>
      %26 = arith.truncf %25 : vector<16x256xf32> to vector<16x256xbf16>
      %c0_22 = arith.constant 0 : index
      %c0_23 = arith.constant 0 : index
      %27 = vector.load %arg8[%c0_22, %c0_23] : memref<16x256xbf16, #tpu.memory_space<vmem>>, vector<16x256xbf16>
      tpu.vector_store %arg8[%c0_22, %c0_23], %26 {strides = array<i32>} : memref<16x256xbf16, #tpu.memory_space<vmem>>, vector<16x256xbf16>,
    } else {
    }
    return
  }
  func.func @transform_0(%arg0: i32, %arg1: i32, %arg2: i32) -> (i32, i32) {
    %c0_i32 = arith.constant 0 : i32
    return %arg0, %arg2 : i32, i32
  }
  func.func @transform_1(%arg0: i32, %arg1: i32, %arg2: i32) -> (i32, i32) {
    %c0_i32 = arith.constant 0 : i32
    return %arg2, %arg1 : i32, i32
  }
  func.func @transform_2(%arg0: i32, %arg1: i32, %arg2: i32) -> (i32, i32) {
    %c0_i32 = arith.constant 0 : i32
    %c0_i32_0 = arith.constant 0 : i32
    return %c0_i32, %arg1 : i32, i32
  }
  func.func @transform_3(%arg0: i32, %arg1: i32, %arg2: i32) -> (i32, i32) {
    %c0_i32 = arith.constant 0 : i32
    %c0_i32_0 = arith.constant 0 : i32
    return %arg2, %c0_i32 : i32, i32
  }
  func.func @transform_4(%arg0: i32, %arg1: i32, %arg2: i32) -> (i32, i32) {
    %c0_i32 = arith.constant 0 : i32
    %c0_i32_0 = arith.constant 0 : i32
    return %c0_i32, %arg1 : i32, i32
  }
  func.func @transform_5(%arg0: i32, %arg1: i32, %arg2: i32) -> (i32, i32) {
    %c0_i32 = arith.constant 0 : i32
    return %arg0, %arg1 : i32, i32
  }
}

</mosaic_0001>

<llo_original>
// kernel: tpu_custom_call.1
$region0: #{tpu_custom_call.1}
  #allocation0 [shape = 'u32[]', space=smem, size = 0x4, offset = 0x4, fixed_abs, tag = 'smem constant byte address 0x4 - core index']
  #allocation1 [shape = 'u32[144,128]{1,0:T(1,128)}', space=vmem, size = 0x12000, scoped, tag = 'internal scratch']
  #allocation2 [shape = 'f32[16,256]{1,0:T(8,128)}', space=vmem, size = 0x4000, scoped, tag = 'scratch operand']
  #allocation3 [shape = 'f32[16,128]{1,0:T(8,128)}', space=vmem, size = 0x2000, scoped, tag = 'scratch operand']
  %s0 = inlined_call_operand.hbm [shape: bf16[16,128], index: 0, kind: input, shape index: {}]
  %s1 = inlined_call_operand.hbm [shape: bf16[128,256], index: 1, kind: input, shape index: {}]
  %s2 = inlined_call_operand.vmem [shape: f32[1,256], index: 2, kind: input, shape index: {}]
  %s3 = inlined_call_operand.hbm [shape: bf16[128,128], index: 3, kind: input, shape index: {}]
  %s4 = inlined_call_operand.hbm [shape: bf16[128,256], index: 4, kind: input, shape index: {}]
  %s5 = inlined_call_operand.hbm [shape: bf16[16,256], index: 5, kind: output, shape index: {}]
  %s6 = sld [smem:[#allocation0]]
  $region62: #{tpu_custom_call.1} parent=0
    _
  %s8 = ssub.s32 1, %s6
  %s9 = scalar_select 0, %s8, %s6
  $region1: #{tpu_custom_call.1} parent=0
    #allocation4 [shape = 'u8[4096]{0}', space=vmem, size = 0x1000, scoped, tag = 'input window, operand 0, single buffered']
    #allocation5 [shape = 's32[1]{0}', space=sflag, size = 0x4, scoped, tag = 'scoped memory for tpu_custom_call.1']
    #allocation6 [shape = 's32[1]{0}', space=sflag, size = 0x4, scoped, tag = 'scoped memory for tpu_custom_call.1']
    #allocation7 [shape = 'u8[65536]{0}', space=vmem, size = 0x10000, scoped, tag = 'input window, operand 1, single buffered']
    #allocation8 [shape = 's32[1]{0}', space=sflag, size = 0x4, scoped, tag = 'scoped memory for tpu_custom_call.1']
    #allocation9 [shape = 'u8[32768]{0}', space=vmem, size = 0x8000, scoped, tag = 'input window, operand 3, single buffered']
    #allocation10 [shape = 'u8[65536]{0}', space=vmem, size = 0x10000, scoped, tag = 'input window, operand 4, single buffered']
    #allocation11 [shape = 's32[1]{0}', space=sflag, size = 0x4, scoped, tag = 'scoped memory for tpu_custom_call.1']
    #allocation12 [shape = 'u8[8192]{0}', space=vmem, size = 0x2000, scoped, tag = 'output window, operand 0, single buffered']
    %10 = vsyncpa [#allocation5], 0
    %11 = vsyncpa [#allocation8], 0
    %12 = vsyncpa [#allocation11], 0
    %13 = vsyncpa [#allocation6], 0
    // Predicated region
    $region2: #{tpu_custom_call.1} parent=1 // pred_check
      _
    $region3: #{tpu_custom_call.1} parent=1 // pred_check_branch
      %15 = sbr.rel (0) target = $region5
    $region4: #{tpu_custom_call.1} parent=1 // pred_region
      %s17 = ssub.s32 128, 128
      %18 = vsyncadd [#allocation5], %s17
      %s19 = sshll.u32 [#allocation4], 4
      %s20 = int_to_ptr.vmem [resolvable:$true] %s19
      %25 = dma.hbm_to_vmem [thread:$0]  %s0, 128, %s20, [#allocation5], 64, 64, 4
    $region5: #{tpu_custom_call.1} parent=1 // pred_fallthru
      _
    // Predicated region
    $region6: #{tpu_custom_call.1} parent=1 // pred_check
      _
    $region7: #{tpu_custom_call.1} parent=1 // pred_check_branch
      %27 = sbr.rel (0) target = $region9
    $region8: #{tpu_custom_call.1} parent=1 // pred_region
      %s29 = ssub.s32 2048, 2048
      %30 = vsyncadd [#allocation8], %s29
      %s31 = sshll.u32 [#allocation7], 4
      %s32 = int_to_ptr.vmem [resolvable:$true] %s31
      %37 = dma.hbm_to_vmem [thread:$0]  %s1, 2048, %s32, [#allocation8], 128, 128, 8
    $region9: #{tpu_custom_call.1} parent=1 // pred_fallthru
      _
    // Predicated region
    $region10: #{tpu_custom_call.1} parent=1 // pred_check
      _
    $region11: #{tpu_custom_call.1} parent=1 // pred_check_branch
      %39 = sbr.rel (0) target = $region13
    $region12: #{tpu_custom_call.1} parent=1 // pred_region
      _
    $region13: #{tpu_custom_call.1} parent=1 // pred_fallthru
      _
    // Predicated region
    $region14: #{tpu_custom_call.1} parent=1 // pred_check
      _
    $region15: #{tpu_custom_call.1} parent=1 // pred_check_branch
      %41 = sbr.rel (0) target = $region17
    $region16: #{tpu_custom_call.1} parent=1 // pred_region
      %s43 = ssub.s32 1024, 1024
      %44 = vsyncadd [#allocation8], %s43
      %s45 = sshll.u32 [#allocation9], 4
      %s46 = int_to_ptr.vmem [resolvable:$true] %s45
      %51 = dma.hbm_to_vmem [thread:$0]  %s3, 1024, %s46, [#allocation8], 64, 64, 4
    $region17: #{tpu_custom_call.1} parent=1 // pred_fallthru
      _
    // Predicated region
    $region18: #{tpu_custom_call.1} parent=1 // pred_check
      _
    $region19: #{tpu_custom_call.1} parent=1 // pred_check_branch
      %53 = sbr.rel (0) target = $region21
    $region20: #{tpu_custom_call.1} parent=1 // pred_region
      %s55 = ssub.s32 2048, 2048
      %56 = vsyncadd [#allocation11], %s55
      %s57 = sshll.u32 [#allocation10], 4
      %s58 = int_to_ptr.vmem [resolvable:$true] %s57
      %63 = dma.hbm_to_vmem [thread:$0]  %s4, 2048, %s58, [#allocation11], 128, 128, 8
    $region21: #{tpu_custom_call.1} parent=1 // pred_fallthru
      _
    // Predicated region
    $region22: #{tpu_custom_call.1} parent=1 // pred_check
      _
    $region23: #{tpu_custom_call.1} parent=1 // pred_check_branch
      %65 = sbr.rel (0) target = $region25
    $region24: #{tpu_custom_call.1} parent=1 // pred_region
      %66 = dma.done [#allocation5], 128
    $region25: #{tpu_custom_call.1} parent=1 // pred_fallthru
      _
    // Predicated region
    $region26: #{tpu_custom_call.1} parent=1 // pred_check
      _
    $region27: #{tpu_custom_call.1} parent=1 // pred_check_branch
      %68 = sbr.rel (0) target = $region29
    $region28: #{tpu_custom_call.1} parent=1 // pred_region
      %69 = dma.done [#allocation8], 2048
    $region29: #{tpu_custom_call.1} parent=1 // pred_fallthru
      _
    // Predicated region
    $region30: #{tpu_custom_call.1} parent=1 // pred_check
      _
    $region31: #{tpu_custom_call.1} parent=1 // pred_check_branch
      %71 = sbr.rel (0) target = $region33
    $region32: #{tpu_custom_call.1} parent=1 // pred_region
      %72 = dma.done [#allocation8], 1024
    $region33: #{tpu_custom_call.1} parent=1 // pred_fallthru
      _
    // Predicated region
    $region34: #{tpu_custom_call.1} parent=1 // pred_check
      _
    $region35: #{tpu_custom_call.1} parent=1 // pred_check_branch
      %74 = sbr.rel (0) target = $region37
    $region36: #{tpu_custom_call.1} parent=1 // pred_region
      %75 = dma.done [#allocation11], 2048
    $region37: #{tpu_custom_call.1} parent=1 // pred_fallthru
      _
    %p77 = scmp.eq.s32.totalorder 0, 0
    // Predicated region
    $region38: #{tpu_custom_call.1} parent=1 // pred_check
      %p78 = pneg %p77
    $region39: #{tpu_custom_call.1} parent=1 // pred_check_branch
      %80 = sbr.rel (%p78) target = $region41
    $region40: #{tpu_custom_call.1} parent=1 // pred_region
      %v81 = vld [vmem:[%s2] sm:$0x3]
      %v83 = vlaneseq
      %v84 = vshrl.u32 %v83, 7
      %v85 = vsub.s32 0, %v84
      %v86 = vrot.slane %v81, %v85
      %v87 = vlaneseq
      %v88 = vshrl.u32 %v87, 7
      %v89 = vsub.s32 1, %v88
      %v90 = vrot.slane %v81, %v89
      %v93 = vadd.f32 %v86, 0.0
      %v94 = vadd.f32 %v90, 0.0
      %95 = vst [vmem:[#allocation2] sm:$0xff] %v93
      %96 = vst [vmem:[#allocation2 + $0x8] sm:$0xff] %v94
      %97 = vst [vmem:[#allocation2 + $0x10] sm:$0xff] %v93
      %98 = vst [vmem:[#allocation2 + $0x18] sm:$0xff] %v94
    $region41: #{tpu_custom_call.1} parent=1 // pred_fallthru
      _
    %p99 = scmp.eq.s32.totalorder 0, 0
    %p100 = pnand %p99, %p77
    %p101 = pneg %p100
    // Predicated region
    $region42: #{tpu_custom_call.1} parent=1 // pred_check
      _
    $region43: #{tpu_custom_call.1} parent=1 // pred_check_branch
      %103 = sbr.rel (%p100) target = $region45
    $region44: #{tpu_custom_call.1} parent=1 // pred_region
      %104 = vst [vmem:[#allocation3] sm:$0xff] 0.0
      %105 = vst [vmem:[#allocation3 + $0x8] sm:$0xff] 0.0
    $region45: #{tpu_custom_call.1} parent=1 // pred_fallthru
      _
    %v106 = vld [vmem:[#allocation4] sm:$0xf]
    %v107 = vld [vmem:[#allocation4 + $0x4] sm:$0xf]
    %v108 = vld [vmem:[#allocation2] sm:$0xff]
    %v109 = vld [vmem:[#allocation2 + $0x8] sm:$0xff]
    %v110 = vld [vmem:[#allocation2 + $0x10] sm:$0xff]
    %v111 = vld [vmem:[#allocation2 + $0x18] sm:$0xff]
    %v112 = vld [vmem:[#allocation7] sm:$0xff]
    %v113 = vld [vmem:[#allocation7 + $0x8] sm:$0xff]
    %v114 = vld [vmem:[#allocation7 + $0x10] sm:$0xff]
    %v115 = vld [vmem:[#allocation7 + $0x18] sm:$0xff]
    %v116 = vld [vmem:[#allocation7 + $0x20] sm:$0xff]
    %v117 = vld [vmem:[#allocation7 + $0x28] sm:$0xff]
    %v118 = vld [vmem:[#allocation7 + $0x30] sm:$0xff]
    %v119 = vld [vmem:[#allocation7 + $0x38] sm:$0xff]
    %v120 = vld [vmem:[#allocation7 + $0x40] sm:$0xff]
    %v121 = vld [vmem:[#allocation7 + $0x48] sm:$0xff]
    %v122 = vld [vmem:[#allocation7 + $0x50] sm:$0xff]
    %v123 = vld [vmem:[#allocation7 + $0x58] sm:$0xff]
    %v124 = vld [vmem:[#allocation7 + $0x60] sm:$0xff]
    %v125 = vld [vmem:[#allocation7 + $0x68] sm:$0xff]
    %v126 = vld [vmem:[#allocation7 + $0x70] sm:$0xff]
    %v127 = vld [vmem:[#allocation7 + $0x78] sm:$0xff]
    %v130 = vunpack.c.l.b16 %v106
    %v131 = vunpack.c.l.b16 %v107
    %v132 = vpack.c.b16 %v131, %v130
    %v150 = vunpack.c.l.b16 %v112
    %v151 = vunpack.c.h.b16 %v112
    %v152 = vunpack.c.l.b16 %v113
    %v153 = vunpack.c.h.b16 %v113
    %v154 = vunpack.c.l.b16 %v114
    %v155 = vunpack.c.h.b16 %v114
    %v156 = vunpack.c.l.b16 %v115
    %v157 = vunpack.c.h.b16 %v115
    %v158 = vunpack.c.l.b16 %v116
    %v159 = vunpack.c.h.b16 %v116
    %v160 = vunpack.c.l.b16 %v117
    %v161 = vunpack.c.h.b16 %v117
    %v162 = vunpack.c.l.b16 %v118
    %v163 = vunpack.c.h.b16 %v118
    %v164 = vunpack.c.l.b16 %v119
    %v165 = vunpack.c.h.b16 %v119
    %v166 = vunpack.c.l.b16 %v120
    %v167 = vunpack.c.h.b16 %v120
    %v168 = vunpack.c.l.b16 %v121
    %v169 = vunpack.c.h.b16 %v121
    %v170 = vunpack.c.l.b16 %v122
    %v171 = vunpack.c.h.b16 %v122
    %v172 = vunpack.c.l.b16 %v123
    %v173 = vunpack.c.h.b16 %v123
    %v174 = vunpack.c.l.b16 %v124
    %v175 = vunpack.c.h.b16 %v124
    %v176 = vunpack.c.l.b16 %v125
    %v177 = vunpack.c.h.b16 %v125
    %v178 = vunpack.c.l.b16 %v126
    %v179 = vunpack.c.h.b16 %v126
    %v180 = vunpack.c.l.b16 %v127
    %v181 = vunpack.c.h.b16 %v127
    %v182 = vpack.c.b16 %v152, %v150
    %v183 = vpack.c.b16 %v153, %v151
    %v184 = vpack.c.b16 %v156, %v154
    %v185 = vpack.c.b16 %v157, %v155
    %v186 = vpack.c.b16 %v160, %v158
    %v187 = vpack.c.b16 %v161, %v159
    %v188 = vpack.c.b16 %v164, %v162
    %v189 = vpack.c.b16 %v165, %v163
    %v190 = vpack.c.b16 %v168, %v166
    %v191 = vpack.c.b16 %v169, %v167
    %v192 = vpack.c.b16 %v172, %v170
    %v193 = vpack.c.b16 %v173, %v171
    %v194 = vpack.c.b16 %v176, %v174
    %v195 = vpack.c.b16 %v177, %v175
    %v196 = vpack.c.b16 %v180, %v178
    %v197 = vpack.c.b16 %v181, %v179
    %214 = vmatprep.subr.bf16.mxu0 %v183
    %215 = vmatpush1.bf16.msra.mxu0 %v182
    %216 = vmatprep.subr.bf16.mxu0 %v185
    %217 = vmatpush1.bf16.msra.mxu0 %v184
    %218 = vmatprep.subr.bf16.mxu0 %v187
    %219 = vmatpush1.bf16.msra.mxu0 %v186
    %220 = vmatprep.subr.bf16.mxu0 %v189
    %221 = vmatpush1.bf16.msra.mxu0 %v188
    %222 = vmatprep.subr.bf16.mxu0 %v191
    %223 = vmatpush1.bf16.msra.mxu0 %v190
    %224 = vmatprep.subr.bf16.mxu0 %v193
    %225 = vmatpush1.bf16.msra.mxu0 %v192
    %226 = vmatprep.subr.bf16.mxu0 %v195
    %227 = vmatpush1.bf16.msra.mxu0 %v194
    %228 = vmatprep.subr.bf16.mxu0 %v197
    %229 = vmatpush1.bf16.msra.mxu0 %v196
    %230 = vmatprep.subr.bf16.mxu0 0
    %231 = vmatpush1.bf16.msra.mxu0 0
    %232 = vmatprep.subr.bf16.mxu0 0
    %233 = vmatpush1.bf16.msra.mxu0 0
    %234 = vmatprep.subr.bf16.mxu0 0
    %235 = vmatpush1.bf16.msra.mxu0 0
    %236 = vmatprep.subr.bf16.mxu0 0
    %237 = vmatpush1.bf16.msra.mxu0 0
    %238 = vmatprep.subr.bf16.mxu0 0
    %239 = vmatpush1.bf16.msra.mxu0 0
    %240 = vmatprep.subr.bf16.mxu0 0
    %241 = vmatpush1.bf16.msra.mxu0 0
    %242 = vmatprep.subr.bf16.mxu0 0
    %243 = vmatpush1.bf16.msra.mxu0 0
    %244 = vmatprep.subr.bf16.mxu0 0
    %245 = vmatpush1.bf16.msra.mxu0 0
    %246 = vmatprep.mubr.bf16.mxu0 0
    %247 = vmatmul.mubr.bf16.gmra.mrb[0].mxu0 %v132
    %v248 = vpop.f32.mrb[0].mxu0
    %v249 = vadd.f32 0.0, %v248
    %v250 = vpop.f32.mrb[0].mxu0
    %v251 = vadd.f32 0.0, %v250
    %v252 = vpop.f32.mrb[0].mxu0
    %v253 = vadd.f32 0.0, %v252
    %v254 = vpop.f32.mrb[0].mxu0
    %v255 = vadd.f32 0.0, %v254
    %256 = vdwg.mxu0
    %v257 = vadd.f32 %v108, %v249
    %v258 = vadd.f32 %v109, %v251
    %v259 = vadd.f32 %v110, %v253
    %v260 = vadd.f32 %v111, %v255
    %261 = vst [vmem:[#allocation2] sm:$0xff] %v257
    %262 = vst [vmem:[#allocation2 + $0x8] sm:$0xff] %v258
    %263 = vst [vmem:[#allocation2 + $0x10] sm:$0xff] %v259
    %264 = vst [vmem:[#allocation2 + $0x18] sm:$0xff] %v260
    // Predicated region
    $region46: #{tpu_custom_call.1} parent=1 // pred_check
      %p265 = pneg %p99
    $region47: #{tpu_custom_call.1} parent=1 // pred_check_branch
      %267 = sbr.rel (%p265) target = $region49
    $region48: #{tpu_custom_call.1} parent=1 // pred_region
      %v268 = vld [vmem:[#allocation3] sm:$0xff]
      %v269 = vld [vmem:[#allocation3 + $0x8] sm:$0xff]
      %v270 = vld [vmem:[#allocation9] sm:$0xf]
      %v271 = vld [vmem:[#allocation9 + $0x4] sm:$0xf]
      %v272 = vld [vmem:[#allocation9 + $0x8] sm:$0xf]
      %v273 = vld [vmem:[#allocation9 + $0xc] sm:$0xf]
      %v274 = vld [vmem:[#allocation9 + $0x10] sm:$0xf]
      %v275 = vld [vmem:[#allocation9 + $0x14] sm:$0xf]
      %v276 = vld [vmem:[#allocation9 + $0x18] sm:$0xf]
      %v277 = vld [vmem:[#allocation9 + $0x1c] sm:$0xf]
      %v278 = vld [vmem:[#allocation9 + $0x20] sm:$0xf]
      %v279 = vld [vmem:[#allocation9 + $0x24] sm:$0xf]
      %v280 = vld [vmem:[#allocation9 + $0x28] sm:$0xf]
      %v281 = vld [vmem:[#allocation9 + $0x2c] sm:$0xf]
      %v282 = vld [vmem:[#allocation9 + $0x30] sm:$0xf]
      %v283 = vld [vmem:[#allocation9 + $0x34] sm:$0xf]
      %v284 = vld [vmem:[#allocation9 + $0x38] sm:$0xf]
      %v285 = vld [vmem:[#allocation9 + $0x3c] sm:$0xf]
      %v302 = vunpack.c.l.b16 %v270
      %v303 = vunpack.c.l.b16 %v271
      %v304 = vunpack.c.l.b16 %v272
      %v305 = vunpack.c.l.b16 %v273
      %v306 = vunpack.c.l.b16 %v274
      %v307 = vunpack.c.l.b16 %v275
      %v308 = vunpack.c.l.b16 %v276
      %v309 = vunpack.c.l.b16 %v277
      %v310 = vunpack.c.l.b16 %v278
      %v311 = vunpack.c.l.b16 %v279
      %v312 = vunpack.c.l.b16 %v280
      %v313 = vunpack.c.l.b16 %v281
      %v314 = vunpack.c.l.b16 %v282
      %v315 = vunpack.c.l.b16 %v283
      %v316 = vunpack.c.l.b16 %v284
      %v317 = vunpack.c.l.b16 %v285
      %v318 = vpack.c.b16 %v303, %v302
      %v319 = vpack.c.b16 %v305, %v304
      %v320 = vpack.c.b16 %v307, %v306
      %v321 = vpack.c.b16 %v309, %v308
      %v322 = vpack.c.b16 %v311, %v310
      %v323 = vpack.c.b16 %v313, %v312
      %v324 = vpack.c.b16 %v315, %v314
      %v325 = vpack.c.b16 %v317, %v316
      %334 = vmatprep.subr.bf16.mxu0 0
      %335 = vmatpush1.bf16.msra.mxu0 %v318
      %336 = vmatprep.subr.bf16.mxu0 0
      %337 = vmatpush1.bf16.msra.mxu0 %v319
      %338 = vmatprep.subr.bf16.mxu0 0
      %339 = vmatpush1.bf16.msra.mxu0 %v320
      %340 = vmatprep.subr.bf16.mxu0 0
      %341 = vmatpush1.bf16.msra.mxu0 %v321
      %342 = vmatprep.subr.bf16.mxu0 0
      %343 = vmatpush1.bf16.msra.mxu0 %v322
      %344 = vmatprep.subr.bf16.mxu0 0
      %345 = vmatpush1.bf16.msra.mxu0 %v323
      %346 = vmatprep.subr.bf16.mxu0 0
      %347 = vmatpush1.bf16.msra.mxu0 %v324
      %348 = vmatprep.subr.bf16.mxu0 0
      %349 = vmatpush1.bf16.msra.mxu0 %v325
      %350 = vmatprep.subr.bf16.mxu0 0
      %351 = vmatpush1.bf16.msra.mxu0 0
      %352 = vmatprep.subr.bf16.mxu0 0
      %353 = vmatpush1.bf16.msra.mxu0 0
      %354 = vmatprep.subr.bf16.mxu0 0
      %355 = vmatpush1.bf16.msra.mxu0 0
      %356 = vmatprep.subr.bf16.mxu0 0
      %357 = vmatpush1.bf16.msra.mxu0 0
      %358 = vmatprep.subr.bf16.mxu0 0
      %359 = vmatpush1.bf16.msra.mxu0 0
      %360 = vmatprep.subr.bf16.mxu0 0
      %361 = vmatpush1.bf16.msra.mxu0 0
      %362 = vmatprep.subr.bf16.mxu0 0
      %363 = vmatpush1.bf16.msra.mxu0 0
      %364 = vmatprep.subr.bf16.mxu0 0
      %365 = vmatpush1.bf16.msra.mxu0 0
      %366 = vmatprep.mubr.bf16.mxu0 0
      %367 = vmatmul.mubr.bf16.gmra.mrb[0].mxu0 %v132
      %v368 = vpop.f32.mrb[0].mxu0
      %v369 = vadd.f32 0.0, %v368
      %v370 = vpop.f32.mrb[0].mxu0
      %v371 = vpop.f32.mrb[0].mxu0
      %v372 = vadd.f32 0.0, %v371
      %v373 = vpop.f32.mrb[0].mxu0
      %374 = vdwg.mxu0
      %v375 = vadd.f32 %v268, %v369
      %v376 = vadd.f32 %v269, %v372
      %377 = vst [vmem:[#allocation3] sm:$0xff] %v375
      %378 = vst [vmem:[#allocation3 + $0x8] sm:$0xff] %v376
    $region49: #{tpu_custom_call.1} parent=1 // pred_fallthru
      _
    // Predicated region
    $region50: #{tpu_custom_call.1} parent=1 // pred_check
      %p379 = pneg %p77
    $region51: #{tpu_custom_call.1} parent=1 // pred_check_branch
      %381 = sbr.rel (%p379) target = $region53
    $region52: #{tpu_custom_call.1} parent=1 // pred_region
      %v382 = vld [vmem:[#allocation3] sm:$0xff]
      %v383 = vld [vmem:[#allocation3 + $0x8] sm:$0xff]
      %v384 = vpack.c.bf16 %v383, %v382
      %v385 = vld [vmem:[#allocation10] sm:$0xff]
      %v386 = vld [vmem:[#allocation10 + $0x8] sm:$0xff]
      %v387 = vld [vmem:[#allocation10 + $0x10] sm:$0xff]
      %v388 = vld [vmem:[#allocation10 + $0x18] sm:$0xff]
      %v389 = vld [vmem:[#allocation10 + $0x20] sm:$0xff]
      %v390 = vld [vmem:[#allocation10 + $0x28] sm:$0xff]
      %v391 = vld [vmem:[#allocation10 + $0x30] sm:$0xff]
      %v392 = vld [vmem:[#allocation10 + $0x38] sm:$0xff]
      %v393 = vld [vmem:[#allocation10 + $0x40] sm:$0xff]
      %v394 = vld [vmem:[#allocation10 + $0x48] sm:$0xff]
      %v395 = vld [vmem:[#allocation10 + $0x50] sm:$0xff]
      %v396 = vld [vmem:[#allocation10 + $0x58] sm:$0xff]
      %v397 = vld [vmem:[#allocation10 + $0x60] sm:$0xff]
      %v398 = vld [vmem:[#allocation10 + $0x68] sm:$0xff]
      %v399 = vld [vmem:[#allocation10 + $0x70] sm:$0xff]
      %v400 = vld [vmem:[#allocation10 + $0x78] sm:$0xff]
      %v417 = vunpack.c.l.b16 %v385
      %v418 = vunpack.c.h.b16 %v385
      %v419 = vunpack.c.l.b16 %v386
      %v420 = vunpack.c.h.b16 %v386
      %v421 = vunpack.c.l.b16 %v387
      %v422 = vunpack.c.h.b16 %v387
      %v423 = vunpack.c.l.b16 %v388
      %v424 = vunpack.c.h.b16 %v388
      %v425 = vunpack.c.l.b16 %v389
      %v426 = vunpack.c.h.b16 %v389
      %v427 = vunpack.c.l.b16 %v390
      %v428 = vunpack.c.h.b16 %v390
      %v429 = vunpack.c.l.b16 %v391
      %v430 = vunpack.c.h.b16 %v391
      %v431 = vunpack.c.l.b16 %v392
      %v432 = vunpack.c.h.b16 %v392
      %v433 = vunpack.c.l.b16 %v393
      %v434 = vunpack.c.h.b16 %v393
      %v435 = vunpack.c.l.b16 %v394
      %v436 = vunpack.c.h.b16 %v394
      %v437 = vunpack.c.l.b16 %v395
      %v438 = vunpack.c.h.b16 %v395
      %v439 = vunpack.c.l.b16 %v396
      %v440 = vunpack.c.h.b16 %v396
      %v441 = vunpack.c.l.b16 %v397
      %v442 = vunpack.c.h.b16 %v397
      %v443 = vunpack.c.l.b16 %v398
      %v444 = vunpack.c.h.b16 %v398
      %v445 = vunpack.c.l.b16 %v399
      %v446 = vunpack.c.h.b16 %v399
      %v447 = vunpack.c.l.b16 %v400
      %v448 = vunpack.c.h.b16 %v400
      %v449 = vpack.c.b16 %v419, %v417
      %v450 = vpack.c.b16 %v420, %v418
      %v451 = vpack.c.b16 %v423, %v421
      %v452 = vpack.c.b16 %v424, %v422
      %v453 = vpack.c.b16 %v427, %v425
      %v454 = vpack.c.b16 %v428, %v426
      %v455 = vpack.c.b16 %v431, %v429
      %v456 = vpack.c.b16 %v432, %v430
      %v457 = vpack.c.b16 %v435, %v433
      %v458 = vpack.c.b16 %v436, %v434
      %v459 = vpack.c.b16 %v439, %v437
      %v460 = vpack.c.b16 %v440, %v438
      %v461 = vpack.c.b16 %v443, %v441
      %v462 = vpack.c.b16 %v444, %v442
      %v463 = vpack.c.b16 %v447, %v445
      %v464 = vpack.c.b16 %v448, %v446
      %481 = vmatprep.subr.bf16.mxu0 %v450
      %482 = vmatpush1.bf16.msra.mxu0 %v449
      %483 = vmatprep.subr.bf16.mxu0 %v452
      %484 = vmatpush1.bf16.msra.mxu0 %v451
      %485 = vmatprep.subr.bf16.mxu0 %v454
      %486 = vmatpush1.bf16.msra.mxu0 %v453
      %487 = vmatprep.subr.bf16.mxu0 %v456
      %488 = vmatpush1.bf16.msra.mxu0 %v455
      %489 = vmatprep.subr.bf16.mxu0 %v458
      %490 = vmatpush1.bf16.msra.mxu0 %v457
      %491 = vmatprep.subr.bf16.mxu0 %v460
      %492 = vmatpush1.bf16.msra.mxu0 %v459
      %493 = vmatprep.subr.bf16.mxu0 %v462
      %494 = vmatpush1.bf16.msra.mxu0 %v461
      %495 = vmatprep.subr.bf16.mxu0 %v464
      %496 = vmatpush1.bf16.msra.mxu0 %v463
      %497 = vmatprep.subr.bf16.mxu0 0
      %498 = vmatpush1.bf16.msra.mxu0 0
      %499 = vmatprep.subr.bf16.mxu0 0
      %500 = vmatpush1.bf16.msra.mxu0 0
      %501 = vmatprep.subr.bf16.mxu0 0
      %502 = vmatpush1.bf16.msra.mxu0 0
      %503 = vmatprep.subr.bf16.mxu0 0
      %504 = vmatpush1.bf16.msra.mxu0 0
      %505 = vmatprep.subr.bf16.mxu0 0
      %506 = vmatpush1.bf16.msra.mxu0 0
      %507 = vmatprep.subr.bf16.mxu0 0
      %508 = vmatpush1.bf16.msra.mxu0 0
      %509 = vmatprep.subr.bf16.mxu0 0
      %510 = vmatpush1.bf16.msra.mxu0 0
      %511 = vmatprep.subr.bf16.mxu0 0
      %512 = vmatpush1.bf16.msra.mxu0 0
      %513 = vmatprep.mubr.bf16.mxu0 0
      %514 = vmatmul.mubr.bf16.gmra.mrb[0].mxu0 %v384
      %v515 = vpop.f32.mrb[0].mxu0
      %v516 = vadd.f32 0.0, %v515
      %v517 = vpop.f32.mrb[0].mxu0
      %v518 = vadd.f32 0.0, %v517
      %v519 = vpop.f32.mrb[0].mxu0
      %v520 = vadd.f32 0.0, %v519
      %v521 = vpop.f32.mrb[0].mxu0
      %v522 = vadd.f32 0.0, %v521
      %523 = vdwg.mxu0
      %v524 = vld [vmem:[#allocation2] sm:$0xff]
      %v525 = vld [vmem:[#allocation2 + $0x8] sm:$0xff]
      %v526 = vld [vmem:[#allocation2 + $0x10] sm:$0xff]
      %v527 = vld [vmem:[#allocation2 + $0x18] sm:$0xff]
      %v528 = vadd.f32 %v524, %v516
      %v529 = vadd.f32 %v525, %v518
      %v530 = vadd.f32 %v526, %v520
      %v531 = vadd.f32 %v527, %v522
      %v532 = vpack.c.bf16 %v530, %v528
      %v533 = vpack.c.bf16 %v531, %v529
      %v536 = vunpack.c.l.b16 %v532
      %v537 = vunpack.c.l.b16 %v533
      %v538 = vunpack.c.h.b16 %v532
      %v539 = vunpack.c.h.b16 %v533
      %v540 = vpack.c.b16 %v537, %v536
      %v541 = vpack.c.b16 %v539, %v538
      %544 = vst [vmem:[#allocation12] sm:$0xff] %v540
      %545 = vst [vmem:[#allocation12 + $0x8] sm:$0xff] %v541
    $region53: #{tpu_custom_call.1} parent=1 // pred_fallthru
      _
    // Predicated region
    $region54: #{tpu_custom_call.1} parent=1 // pred_check
      _
    $region55: #{tpu_custom_call.1} parent=1 // pred_check_branch
      %547 = sbr.rel (0) target = $region57
    $region56: #{tpu_custom_call.1} parent=1 // pred_region
      %s549 = ssub.s32 256, 256
      %550 = vsyncadd [#allocation6], %s549
      %s551 = sshll.u32 [#allocation12], 4
      %s552 = int_to_ptr.vmem [resolvable:$true] %s551
      %557 = dma.vmem_to_hbm [thread:$0]  %s552, 256, %s5, [#allocation6], 128, 128, 8
    $region57: #{tpu_custom_call.1} parent=1 // pred_fallthru
      _
    // Predicated region
    $region58: #{tpu_custom_call.1} parent=1 // pred_check
      _
    $region59: #{tpu_custom_call.1} parent=1 // pred_check_branch
      %559 = sbr.rel (0) target = $region61
    $region60: #{tpu_custom_call.1} parent=1 // pred_region
      %560 = dma.done [#allocation6], 256
    $region61: #{tpu_custom_call.1} parent=1 // pred_fallthru
      _
    %561 = vsyncpa [#allocation5], 1
    %562 = vsyncpa [#allocation8], 1
    %563 = vsyncpa [#allocation11], 1
    %564 = vsyncpa [#allocation6], 1

</llo_original>
